<compile_context>
chip_gen: v7x
topology: tpu7x:2x2x1
jax: 0.10.0
libtpu: 0.0.40
codegen_flags: <defaults>
</compile_context>

<pallas_src>
import jax
import jax.numpy as jnp
from jax.experimental import pallas as pl
from jax.experimental.pallas import tpu as pltpu

EPS = 1e-5


# ----------------------------------------------------------------------------
# Fused residual-block kernel (one batch element per grid step)
# ----------------------------------------------------------------------------
def make_residual_block_kernel(H, W, Cin, Cout, downsample):
    """conv1+bn1+relu -> (optional downsample conv+bn) -> conv2+bn2+add+relu."""

    def conv3x3(pad_ref, w_ref):
        # pad_ref: (H+2, W*c) vertically zero-padded bf16 activation slab.
        # w_ref  : (3*W*c, W*Cout) bf16 block-Toeplitz weight (vertical taps
        #          stacked along K; horizontal taps, horizontal zero padding
        #          and BN scale folded in).  One deep MXU matmul, f32 acc.
        slab = jnp.concatenate(
            [pad_ref[dy:dy + H, :] for dy in range(3)], axis=-1)
        return jnp.dot(slab, w_ref[...], preferred_element_type=jnp.float32)

    def kernel(*refs):
        if downsample:
            (x_ref, w1_ref, b1_ref, w2_ref, b2_ref, wd_ref, bd_ref,
             out_ref, xpad_ref, hpad_ref) = refs
        else:
            (x_ref, w1_ref, b1_ref, w2_ref, b2_ref,
             out_ref, xpad_ref, hpad_ref) = refs

        x = x_ref[0]  # (H, W*Cin), f32

        # Padded input slab (bf16). Only boundary rows are zeroed; rows 1..H
        # are fully overwritten right after.
        xpad_ref[0:1, :] = jnp.zeros((1, W * Cin), jnp.bfloat16)
        xpad_ref[H + 1:H + 2, :] = jnp.zeros((1, W * Cin), jnp.bfloat16)
        xpad_ref[1:H + 1, :] = x.astype(jnp.bfloat16)

        # conv1 + bn1 (scale folded into w1) + relu, kept in f32.
        h = jnp.maximum(conv3x3(xpad_ref, w1_ref) + b1_ref[...], 0.0)

        # Shortcut path (3x3 conv + BN when channel counts differ, per spec).
        if downsample:
            res = conv3x3(xpad_ref, wd_ref) + bd_ref[...]
        else:
            res = x  # valid: Cin == Cout on this branch

        # Padded h slab (bf16) for conv2 (boundary rows only).
        hpad_ref[0:1, :] = jnp.zeros((1, W * Cout), jnp.bfloat16)
        hpad_ref[H + 1:H + 2, :] = jnp.zeros((1, W * Cout), jnp.bfloat16)
        hpad_ref[1:H + 1, :] = h.astype(jnp.bfloat16)

        # conv2 + bn2 (scale folded into w2) + residual add + relu.
        out = conv3x3(hpad_ref, w2_ref) + b2_ref[...] + res
        out_ref[0] = jnp.maximum(out, 0.0)

    return kernel


# ----------------------------------------------------------------------------
# Parameter preparation (done once, not per forward call)
# ----------------------------------------------------------------------------
def _fold_bn(bn):
    inv = bn["gamma"] * jax.lax.rsqrt(bn["var"] + EPS)
    return inv, bn["beta"] - bn["mean"] * inv


def _toeplitz_weight(w_hwio, W, scale):
    """(3, 3, Cin, Cout) conv weight -> (3*W*Cin, W*Cout) bf16 block-Toeplitz
    matrix.  Horizontal taps, horizontal zero padding and the folded BN scale
    are baked in; the 3 vertical taps are stacked along the K dimension to
    match the in-kernel slab concatenation."""
    _, _, Cin, Cout = w_hwio.shape
    v = jnp.arange(W)[None, :, None]      # input column index
    wo = jnp.arange(W)[None, None, :]     # output column index
    dx = jnp.arange(3)[:, None, None]
    ind = (v == wo + dx - 1).astype(w_hwio.dtype)            # (3, W, W)
    wt = jnp.einsum("yxio,xvw->yviwo", w_hwio, ind)           # (3, W, Cin, W, Cout)
    wt = wt * scale[None, None, None, None, :]                # fold BN scale
    return wt.reshape(3 * W * Cin, W * Cout).astype(jnp.bfloat16)


def prepare_block_params(raw, W):
    Cout = raw["w1"].shape[-1]
    s1, b1 = _fold_bn(raw["bn1"])
    s2, b2 = _fold_bn(raw["bn2"])
    params = dict(
        downsample=raw["downsample"], cout=Cout,
        w1=_toeplitz_weight(raw["w1"], W, s1),
        b1=jnp.tile(b1, W)[None, :].astype(jnp.float32),
        w2=_toeplitz_weight(raw["w2"], W, s2),
        b2=jnp.tile(b2, W)[None, :].astype(jnp.float32),
    )
    if raw["downsample"]:
        sd, bd = _fold_bn(raw["bnd"])
        params.update(wd=_toeplitz_weight(raw["wd"], W, sd),
                      bd=jnp.tile(bd, W)[None, :].astype(jnp.float32))
    return params


# ----------------------------------------------------------------------------
# Forward wrapper (NCHW in / NCHW out, matching the PyTorch module)
# ----------------------------------------------------------------------------
def residual_block_forward(params, x_nchw):
    N, Cin, H, W = x_nchw.shape
    Cout = params["cout"]
    downsample = params["downsample"]

    # NCHW -> lane-dense (N, H, W*Cin) slab at the boundary only.
    # TODO(synk): keep this slab layout between chained blocks and only
    #             transpose at network boundaries.
    x_slab = jnp.transpose(x_nchw, (0, 2, 3, 1)).reshape(N, H, W * Cin)
    x_slab = x_slab.astype(jnp.float32)

    args = [x_slab, params["w1"], params["b1"], params["w2"], params["b2"]]
    in_specs = [
        pl.BlockSpec((1, H, W * Cin), lambda n: (n, 0, 0)),
        pl.BlockSpec((3 * W * Cin, W * Cout), lambda n: (0, 0)),
        pl.BlockSpec((1, W * Cout), lambda n: (0, 0)),
        pl.BlockSpec((3 * W * Cout, W * Cout), lambda n: (0, 0)),
        pl.BlockSpec((1, W * Cout), lambda n: (0, 0)),
    ]
    if downsample:
        args += [params["wd"], params["bd"]]
        in_specs += [
            pl.BlockSpec((3 * W * Cin, W * Cout), lambda n: (0, 0)),
            pl.BlockSpec((1, W * Cout), lambda n: (0, 0)),
        ]

    out_slab = pl.pallas_call(
        make_residual_block_kernel(H, W, Cin, Cout, downsample),
        out_shape=jax.ShapeDtypeStruct((N, H, W * Cout), jnp.float32),
        grid=(N,),
        in_specs=in_specs,
        out_specs=pl.BlockSpec((1, H, W * Cout), lambda n: (n, 0, 0)),
        scratch_shapes=[
            pltpu.VMEM((H + 2, W * Cin), jnp.bfloat16),   # padded x slab
            pltpu.VMEM((H + 2, W * Cout), jnp.bfloat16),  # padded h slab
        ],
        compiler_params=pltpu.CompilerParams(
            dimension_semantics=("parallel",)),
    )(*args)

    return jnp.transpose(out_slab.reshape(N, H, W, Cout), (0, 3, 1, 2))


# ----------------------------------------------------------------------------
# Pure-JAX reference (for numerical validation)
# ----------------------------------------------------------------------------
def reference_forward(raw, x_nchw):
    def conv(x, w_hwio):
        return jax.lax.conv_general_dilated(
            x, jnp.transpose(w_hwio, (3, 2, 0, 1)), (1, 1), "SAME",
            dimension_numbers=("NCHW", "OIHW", "NCHW"))

    def bn(x, p):
        inv = p["gamma"] * jax.lax.rsqrt(p["var"] + EPS)
        shift = p["beta"] - p["mean"] * inv
        return x * inv[None, :, None, None] + shift[None, :, None, None]

    out = jax.nn.relu(bn(conv(x_nchw, raw["w1"]), raw["bn1"]))
    out = bn(conv(out, raw["w2"]), raw["bn2"])
    res = x_nchw
    if raw["downsample"]:
        res = bn(conv(x_nchw, raw["wd"]), raw["bnd"])
    return jax.nn.relu(out + res)


# ----------------------------------------------------------------------------
# Param init + test
# ----------------------------------------------------------------------------
def init_raw_params(key, in_channels, out_channels):
    ks = iter(jax.random.split(key, 16))

    def conv_w(cin, cout):
        return 0.1 * jax.random.normal(next(ks), (3, 3, cin, cout), jnp.float32)

    def bn_p(c):
        return dict(
            gamma=1.0 + 0.1 * jax.random.normal(next(ks), (c,), jnp.float32),
            beta=0.1 * jax.random.normal(next(ks), (c,), jnp.float32),
            mean=0.05 * jax.random.normal(next(ks), (c,), jnp.float32),
            var=1.0 + 0.1 * jax.random.uniform(next(ks), (c,), jnp.float32),
        )

    downsample = in_channels != out_channels
    raw = dict(downsample=downsample,
               w1=conv_w(in_channels, out_channels), bn1=bn_p(out_channels),
               w2=conv_w(out_channels, out_channels), bn2=bn_p(out_channels))
    if downsample:
        raw["wd"] = conv_w(in_channels, out_channels)
        raw["bnd"] = bn_p(out_channels)
    return raw


if __name__ == "__main__":
    N, H, W = 2, 16, 16
    key = jax.random.PRNGKey(0)

    # Exercise both the downsample shortcut (Cin != Cout) and identity shortcut.
    for (cin, cout) in [(4, 8), (8, 8)]:
        key, pkey, xkey = jax.random.split(key, 3)
        raw = init_raw_params(pkey, cin, cout)
        params = prepare_block_params(raw, W)
        x = jax.random.normal(xkey, (N, cin, H, W), jnp.float32)  # NCHW

        out = residual_block_forward(params, x)
        out = jax.block_until_ready(out)

        assert out.shape == (N, cout, H, W), out.shape
        assert bool(jnp.all(jnp.isfinite(out)))

        ref = reference_forward(raw, x)
        max_diff = float(jnp.max(jnp.abs(out - ref)))
        # bf16 MXU path vs. f32 reference -> slightly looser tolerance.
        assert bool(jnp.allclose(out, ref, atol=5e-2, rtol=5e-2)), max_diff

    print("KERNEL_OK")
</pallas_src>

<mosaic_0001>
module attributes {stable_mosaic.version = 11 : i64} {
  func.func @kernel(%arg0: i32, %arg1: memref<1x16x64xf32, #tpu.memory_space<vmem>>, %arg2: memref<192x128xbf16, #tpu.memory_space<vmem>>, %arg3: memref<1x128xf32, #tpu.memory_space<vmem>>, %arg4: memref<384x128xbf16, #tpu.memory_space<vmem>>, %arg5: memref<1x128xf32, #tpu.memory_space<vmem>>, %arg6: memref<192x128xbf16, #tpu.memory_space<vmem>>, %arg7: memref<1x128xf32, #tpu.memory_space<vmem>>, %arg8: memref<1x16x128xf32, #tpu.memory_space<vmem>>, %arg9: memref<18x64xbf16, #tpu.memory_space<vmem>>, %arg10: memref<18x128xbf16, #tpu.memory_space<vmem>>) attributes {dimension_semantics = [#tpu.dimension_semantics<parallel>], iteration_bounds = array<i64: 2>, scalar_prefetch = 0 : i64, scratch_operands = 2 : i64, tpu.core_type = #tpu.core_type<tc>, window_params = [{transform_indices = @transform_0, window_bounds = array<i64: 1, 16, 64>}, {pipeline_mode = #tpu.pipeline_mode<synchronous>, transform_indices = @transform_1, window_bounds = array<i64: 192, 128>}, {pipeline_mode = #tpu.pipeline_mode<synchronous>, transform_indices = @transform_2, window_bounds = array<i64: 1, 128>}, {pipeline_mode = #tpu.pipeline_mode<synchronous>, transform_indices = @transform_3, window_bounds = array<i64: 384, 128>}, {pipeline_mode = #tpu.pipeline_mode<synchronous>, transform_indices = @transform_4, window_bounds = array<i64: 1, 128>}, {pipeline_mode = #tpu.pipeline_mode<synchronous>, transform_indices = @transform_5, window_bounds = array<i64: 192, 128>}, {pipeline_mode = #tpu.pipeline_mode<synchronous>, transform_indices = @transform_6, window_bounds = array<i64: 1, 128>}, {transform_indices = @transform_7, window_bounds = array<i64: 1, 16, 128>}]} {
    %c0 = arith.constant 0 : index
    %c0_0 = arith.constant 0 : index
    %c0_1 = arith.constant 0 : index
    %0 = vector.load %arg1[%c0, %c0_0, %c0_1] : memref<1x16x64xf32, #tpu.memory_space<vmem>>, vector<1x16x64xf32>
    %1 = vector.shape_cast %0 : vector<1x16x64xf32> to vector<16x64xf32>
    %cst = arith.constant 0.000000e+00 : bf16
    %2 = vector.broadcast %cst : bf16 to vector<1x64xbf16>
    %c0_2 = arith.constant 0 : index
    %c0_3 = arith.constant 0 : index
    %3 = vector.load %arg9[%c0_2, %c0_3] : memref<18x64xbf16, #tpu.memory_space<vmem>>, vector<1x64xbf16>
    tpu.vector_store %arg9[%c0_2, %c0_3], %2 {strides = array<i32>} : memref<18x64xbf16, #tpu.memory_space<vmem>>, vector<1x64xbf16>,
    %cst_4 = arith.constant 0.000000e+00 : bf16
    %4 = vector.broadcast %cst_4 : bf16 to vector<1x64xbf16>
    %c17 = arith.constant 17 : index
    %c0_5 = arith.constant 0 : index
    %5 = vector.load %arg9[%c17, %c0_5] : memref<18x64xbf16, #tpu.memory_space<vmem>>, vector<1x64xbf16>
    tpu.vector_store %arg9[%c17, %c0_5], %4 {strides = array<i32>} : memref<18x64xbf16, #tpu.memory_space<vmem>>, vector<1x64xbf16>,
    %6 = arith.truncf %1 : vector<16x64xf32> to vector<16x64xbf16>
    %c1 = arith.constant 1 : index
    %c0_6 = arith.constant 0 : index
    %7 = vector.load %arg9[%c1, %c0_6] : memref<18x64xbf16, #tpu.memory_space<vmem>>, vector<16x64xbf16>
    tpu.vector_store %arg9[%c1, %c0_6], %6 {strides = array<i32>} : memref<18x64xbf16, #tpu.memory_space<vmem>>, vector<16x64xbf16>,
    %c0_7 = arith.constant 0 : index
    %c0_8 = arith.constant 0 : index
    %8 = vector.load %arg9[%c0_7, %c0_8] : memref<18x64xbf16, #tpu.memory_space<vmem>>, vector<16x64xbf16>
    %c1_9 = arith.constant 1 : index
    %c0_10 = arith.constant 0 : index
    %9 = vector.load %arg9[%c1_9, %c0_10] : memref<18x64xbf16, #tpu.memory_space<vmem>>, vector<16x64xbf16>
    %c2 = arith.constant 2 : index
    %c0_11 = arith.constant 0 : index
    %10 = vector.load %arg9[%c2, %c0_11] : memref<18x64xbf16, #tpu.memory_space<vmem>>, vector<16x64xbf16>
    %11 = tpu.concatenate %8, %9, %10 in 1 : vector<16x64xbf16>, vector<16x64xbf16>, vector<16x64xbf16> -> vector<16x192xbf16>
    %c0_12 = arith.constant 0 : index
    %c0_13 = arith.constant 0 : index
    %12 = vector.load %arg2[%c0_12, %c0_13] : memref<192x128xbf16, #tpu.memory_space<vmem>>, vector<192x128xbf16>
    %cst_14 = arith.constant dense<0.000000e+00> : vector<16x128xf32>
    %13 = tpu.matmul %11, %12, %cst_14 {dimension_numbers = #tpu.dot_dimension_numbers<[1], [0], [0], [1], [0, 0, 1, 1], [], []>} : vector<16x192xbf16>, vector<192x128xbf16>, vector<16x128xf32> -> vector<16x128xf32>
    %c0_15 = arith.constant 0 : index
    %c0_16 = arith.constant 0 : index
    %14 = vector.load %arg3[%c0_15, %c0_16] : memref<1x128xf32, #tpu.memory_space<vmem>>, vector<1x128xf32>
    %15 = vector.broadcast %14 : vector<1x128xf32> to vector<16x128xf32>
    %16 = arith.addf %13, %15 : vector<16x128xf32>
    %cst_17 = arith.constant 0.000000e+00 : f32
    %17 = vector.broadcast %cst_17 : f32 to vector<16x128xf32>
    %18 = arith.maximumf %16, %17 : vector<16x128xf32>
    %c0_18 = arith.constant 0 : index
    %c0_19 = arith.constant 0 : index
    %19 = vector.load %arg9[%c0_18, %c0_19] : memref<18x64xbf16, #tpu.memory_space<vmem>>, vector<16x64xbf16>
    %c1_20 = arith.constant 1 : index
    %c0_21 = arith.constant 0 : index
    %20 = vector.load %arg9[%c1_20, %c0_21] : memref<18x64xbf16, #tpu.memory_space<vmem>>, vector<16x64xbf16>
    %c2_22 = arith.constant 2 : index
    %c0_23 = arith.constant 0 : index
    %21 = vector.load %arg9[%c2_22, %c0_23] : memref<18x64xbf16, #tpu.memory_space<vmem>>, vector<16x64xbf16>
    %22 = tpu.concatenate %19, %20, %21 in 1 : vector<16x64xbf16>, vector<16x64xbf16>, vector<16x64xbf16> -> vector<16x192xbf16>
    %c0_24 = arith.constant 0 : index
    %c0_25 = arith.constant 0 : index
    %23 = vector.load %arg6[%c0_24, %c0_25] : memref<192x128xbf16, #tpu.memory_space<vmem>>, vector<192x128xbf16>
    %cst_26 = arith.constant dense<0.000000e+00> : vector<16x128xf32>
    %24 = tpu.matmul %22, %23, %cst_26 {dimension_numbers = #tpu.dot_dimension_numbers<[1], [0], [0], [1], [0, 0, 1, 1], [], []>} : vector<16x192xbf16>, vector<192x128xbf16>, vector<16x128xf32> -> vector<16x128xf32>
    %c0_27 = arith.constant 0 : index
    %c0_28 = arith.constant 0 : index
    %25 = vector.load %arg7[%c0_27, %c0_28] : memref<1x128xf32, #tpu.memory_space<vmem>>, vector<1x128xf32>
    %26 = vector.broadcast %25 : vector<1x128xf32> to vector<16x128xf32>
    %27 = arith.addf %24, %26 : vector<16x128xf32>
    %cst_29 = arith.constant 0.000000e+00 : bf16
    %28 = vector.broadcast %cst_29 : bf16 to vector<1x128xbf16>
    %c0_30 = arith.constant 0 : index
    %c0_31 = arith.constant 0 : index
    %29 = vector.load %arg10[%c0_30, %c0_31] : memref<18x128xbf16, #tpu.memory_space<vmem>>, vector<1x128xbf16>
    tpu.vector_store %arg10[%c0_30, %c0_31], %28 {strides = array<i32>} : memref<18x128xbf16, #tpu.memory_space<vmem>>, vector<1x128xbf16>,
    %cst_32 = arith.constant 0.000000e+00 : bf16
    %30 = vector.broadcast %cst_32 : bf16 to vector<1x128xbf16>
    %c17_33 = arith.constant 17 : index
    %c0_34 = arith.constant 0 : index
    %31 = vector.load %arg10[%c17_33, %c0_34] : memref<18x128xbf16, #tpu.memory_space<vmem>>, vector<1x128xbf16>
    tpu.vector_store %arg10[%c17_33, %c0_34], %30 {strides = array<i32>} : memref<18x128xbf16, #tpu.memory_space<vmem>>, vector<1x128xbf16>,
    %32 = arith.truncf %18 : vector<16x128xf32> to vector<16x128xbf16>
    %c1_35 = arith.constant 1 : index
    %c0_36 = arith.constant 0 : index
    %33 = vector.load %arg10[%c1_35, %c0_36] : memref<18x128xbf16, #tpu.memory_space<vmem>>, vector<16x128xbf16>
    tpu.vector_store %arg10[%c1_35, %c0_36], %32 {strides = array<i32>} : memref<18x128xbf16, #tpu.memory_space<vmem>>, vector<16x128xbf16>,
    %c0_37 = arith.constant 0 : index
    %c0_38 = arith.constant 0 : index
    %34 = vector.load %arg10[%c0_37, %c0_38] : memref<18x128xbf16, #tpu.memory_space<vmem>>, vector<16x128xbf16>
    %c1_39 = arith.constant 1 : index
    %c0_40 = arith.constant 0 : index
    %35 = vector.load %arg10[%c1_39, %c0_40] : memref<18x128xbf16, #tpu.memory_space<vmem>>, vector<16x128xbf16>
    %c2_41 = arith.constant 2 : index
    %c0_42 = arith.constant 0 : index
    %36 = vector.load %arg10[%c2_41, %c0_42] : memref<18x128xbf16, #tpu.memory_space<vmem>>, vector<16x128xbf16>
    %37 = tpu.concatenate %34, %35, %36 in 1 : vector<16x128xbf16>, vector<16x128xbf16>, vector<16x128xbf16> -> vector<16x384xbf16>
    %c0_43 = arith.constant 0 : index
    %c0_44 = arith.constant 0 : index
    %38 = vector.load %arg4[%c0_43, %c0_44] : memref<384x128xbf16, #tpu.memory_space<vmem>>, vector<384x128xbf16>
    %cst_45 = arith.constant dense<0.000000e+00> : vector<16x128xf32>
    %39 = tpu.matmul %37, %38, %cst_45 {dimension_numbers = #tpu.dot_dimension_numbers<[1], [0], [0], [1], [0, 0, 1, 1], [], []>} : vector<16x384xbf16>, vector<384x128xbf16>, vector<16x128xf32> -> vector<16x128xf32>
    %c0_46 = arith.constant 0 : index
    %c0_47 = arith.constant 0 : index
    %40 = vector.load %arg5[%c0_46, %c0_47] : memref<1x128xf32, #tpu.memory_space<vmem>>, vector<1x128xf32>
    %41 = vector.broadcast %40 : vector<1x128xf32> to vector<16x128xf32>
    %42 = arith.addf %39, %41 : vector<16x128xf32>
    %43 = arith.addf %42, %27 : vector<16x128xf32>
    %cst_48 = arith.constant 0.000000e+00 : f32
    %44 = vector.broadcast %cst_48 : f32 to vector<16x128xf32>
    %45 = arith.maximumf %43, %44 : vector<16x128xf32>
    %c0_49 = arith.constant 0 : index
    %c0_50 = arith.constant 0 : index
    %c0_51 = arith.constant 0 : index
    %46 = vector.load %arg8[%c0_49, %c0_50, %c0_51] : memref<1x16x128xf32, #tpu.memory_space<vmem>>, vector<1x16x128xf32>
    %47 = vector.shape_cast %46 : vector<1x16x128xf32> to vector<16x128xf32>
    %48 = vector.shape_cast %45 : vector<16x128xf32> to vector<1x16x128xf32>
    tpu.vector_store %arg8[%c0_49, %c0_50, %c0_51], %48 {strides = array<i32>} : memref<1x16x128xf32, #tpu.memory_space<vmem>>, vector<1x16x128xf32>,
    return
  }
  func.func @transform_0(%arg0: i32) -> (i32, i32, i32) {
    %c0_i32 = arith.constant 0 : i32
    %c0_i32_0 = arith.constant 0 : i32
    %c0_i32_1 = arith.constant 0 : i32
    return %arg0, %c0_i32, %c0_i32_0 : i32, i32, i32
  }
  func.func @transform_1(%arg0: i32) -> (i32, i32) {
    %c0_i32 = arith.constant 0 : i32
    %c0_i32_0 = arith.constant 0 : i32
    %c0_i32_1 = arith.constant 0 : i32
    return %c0_i32, %c0_i32_0 : i32, i32
  }
  func.func @transform_2(%arg0: i32) -> (i32, i32) {
    %c0_i32 = arith.constant 0 : i32
    %c0_i32_0 = arith.constant 0 : i32
    %c0_i32_1 = arith.constant 0 : i32
    return %c0_i32, %c0_i32_0 : i32, i32
  }
  func.func @transform_3(%arg0: i32) -> (i32, i32) {
    %c0_i32 = arith.constant 0 : i32
    %c0_i32_0 = arith.constant 0 : i32
    %c0_i32_1 = arith.constant 0 : i32
    return %c0_i32, %c0_i32_0 : i32, i32
  }
  func.func @transform_4(%arg0: i32) -> (i32, i32) {
    %c0_i32 = arith.constant 0 : i32
    %c0_i32_0 = arith.constant 0 : i32
    %c0_i32_1 = arith.constant 0 : i32
    return %c0_i32, %c0_i32_0 : i32, i32
  }
  func.func @transform_5(%arg0: i32) -> (i32, i32) {
    %c0_i32 = arith.constant 0 : i32
    %c0_i32_0 = arith.constant 0 : i32
    %c0_i32_1 = arith.constant 0 : i32
    return %c0_i32, %c0_i32_0 : i32, i32
  }
  func.func @transform_6(%arg0: i32) -> (i32, i32) {
    %c0_i32 = arith.constant 0 : i32
    %c0_i32_0 = arith.constant 0 : i32
    %c0_i32_1 = arith.constant 0 : i32
    return %c0_i32, %c0_i32_0 : i32, i32
  }
  func.func @transform_7(%arg0: i32) -> (i32, i32, i32) {
    %c0_i32 = arith.constant 0 : i32
    %c0_i32_0 = arith.constant 0 : i32
    %c0_i32_1 = arith.constant 0 : i32
    return %arg0, %c0_i32, %c0_i32_0 : i32, i32, i32
  }
}

</mosaic_0001>

<llo_original>
// kernel: tpu_custom_call.1
$region0: #{tpu_custom_call.1}
  #allocation0 [shape = 'u32[]', space=smem, size = 0x4, offset = 0x4, fixed_abs, tag = 'smem constant byte address 0x4 - core index']
  #allocation1 [shape = 'u32[144,128]{1,0:T(1,128)}', space=vmem, size = 0x12000, scoped, tag = 'internal scratch']
  #allocation2 [shape = 'bf16[18,64]{1,0:T(8,128)(2,1)}', space=vmem, size = 0x1800, scoped, tag = 'scratch operand']
  #allocation3 [shape = 'bf16[18,128]{1,0:T(8,128)(2,1)}', space=vmem, size = 0x1800, scoped, tag = 'scratch operand']
  %s0 = inlined_call_operand.hbm [shape: f32[2,16,64], index: 0, kind: input, shape index: {}]
  %s1 = inlined_call_operand.hbm [shape: bf16[192,128], index: 1, kind: input, shape index: {}]
  %s2 = inlined_call_operand.vmem [shape: f32[1,128], index: 2, kind: input, shape index: {}]
  %s3 = inlined_call_operand.hbm [shape: bf16[384,128], index: 3, kind: input, shape index: {}]
  %s4 = inlined_call_operand.vmem [shape: f32[1,128], index: 4, kind: input, shape index: {}]
  %s5 = inlined_call_operand.hbm [shape: bf16[192,128], index: 5, kind: input, shape index: {}]
  %s6 = inlined_call_operand.vmem [shape: f32[1,128], index: 6, kind: input, shape index: {}]
  %s7 = inlined_call_operand.hbm [shape: f32[2,16,128], index: 7, kind: output, shape index: {}]
  %s8 = sld [smem:[#allocation0]]
  $region77: #{tpu_custom_call.1} parent=0
    _
  %s10 = ssub.s32 1, %s8
  %s11 = scalar_select 0, %s10, %s8
  $region1: #{tpu_custom_call.1} parent=0
    #allocation4 [shape = 'u8[16384]{0}', space=vmem, size = 0x4000, scoped, tag = 'input window, operand 0']
    #allocation5 [shape = 's32[2]{0}', space=sflag, size = 0x8, scoped, tag = 'scoped memory for tpu_custom_call.1']
    #allocation6 [shape = 's32[2]{0}', space=sflag, size = 0x8, scoped, tag = 'scoped memory for tpu_custom_call.1']
    #allocation7 [shape = 'u8[49152]{0}', space=vmem, size = 0xc000, scoped, tag = 'input window, operand 1, single buffered']
    #allocation8 [shape = 's32[1]{0}', space=sflag, size = 0x4, scoped, tag = 'scoped memory for tpu_custom_call.1']
    #allocation9 [shape = 'u8[98304]{0}', space=vmem, size = 0x18000, scoped, tag = 'input window, operand 3, single buffered']
    #allocation10 [shape = 'u8[49152]{0}', space=vmem, size = 0xc000, scoped, tag = 'input window, operand 5, single buffered']
    #allocation11 [shape = 's32[1]{0}', space=sflag, size = 0x4, scoped, tag = 'scoped memory for tpu_custom_call.1']
    #allocation12 [shape = 'u8[16384]{0}', space=vmem, size = 0x4000, scoped, tag = 'output window, operand 0']
    %12 = vsyncpa [#allocation5], 0
    %s13 = scalar_lea.sflag [#allocation5], 1
    %14 = vsyncpa %s13, 0
    %15 = vsyncpa [#allocation8], 0
    %16 = vsyncpa [#allocation11], 0
    %17 = vsyncpa [#allocation6], 0
    %s18 = scalar_lea.sflag [#allocation6], 1
    %19 = vsyncpa %s18, 0
    loop: start=0, step=1, limit=4
    $region2: #{tpu_custom_call.1} parent=1 // loop_pre_header
      _
    $region3: #{tpu_custom_call.1} parent=1 // loop_header
      %s21 = sphi 0, %s25
      %p22 = scmp.ge.s32.totalorder %s21, 4
      %s31 = sphi 0, %s33
      %s34 = sphi 0, %s31
      %s35 = sphi 0, %s34
      %s51 = sphi 0, %s35
      %s55 = sphi 0, %s55
      %s57 = sphi 0, %s55
      %s58 = sphi 0, %s57
      %s72 = sphi 0, %s58
      %s76 = sphi 0, %s76
      %s78 = sphi 0, %s76
      %s79 = sphi 0, %s78
      %s93 = sphi 0, %s79
      %s97 = sphi 0, %s97
      %s99 = sphi 0, %s97
      %s100 = sphi 0, %s99
      %s114 = sphi 0, %s100
      %s118 = sphi 0, %s118
      %s120 = sphi 0, %s118
      %s121 = sphi 0, %s120
      %s135 = sphi 0, %s121
      %s139 = sphi 0, %s139
      %s141 = sphi 0, %s139
      %s142 = sphi 0, %s141
      %s156 = sphi 0, %s142
      %s160 = sphi 0, %s160
      %s162 = sphi 0, %s160
      %s163 = sphi 0, %s162
      %s177 = sphi 0, %s163
      %s183 = sphi 0, %s185
      %s186 = sphi 0, %s183
      %s187 = sphi 0, %s186
      %s203 = sphi 0, %s187
    $region4: #{tpu_custom_call.1} parent=1 // loop_header_branch
      %24 = sbr.rel (%p22) target = $region8
    $region5: #{tpu_custom_call.1} parent=1 // loop_body
      %s26 = ssub.s32 %s21, 1
      %s27 = ssub.s32 %s21, 2
      %s28 = sadd.s32 %s21, 1
      %s29 = ssub.s32 %s21, %s28
      %p30 = scmp.eq.s32.totalorder %s29, 0
      %s32 = sadd.s32 %s31, 1
      %s33 = scalar_select %p30, %s31, %s32
      %p36 = pneg %p30
      %p37 = scmp.eq.s32.totalorder %s21, 1
      %p38 = por %p36, %p37
      %p39 = scmp.ne.s32.totalorder %s31, %s34
      %p40 = scmp.eq.s32.totalorder %s21, 0
      %p41 = por %p39, %p40
      %p42 = scmp.ne.s32.totalorder %s31, %s34
      %p43 = scmp.eq.s32.totalorder %s26, 1
      %p44 = por %p42, %p43
      %p45 = scmp.ne.s32.totalorder %s34, %s35
      %p46 = scmp.eq.s32.totalorder %s26, 0
      %p47 = por %p45, %p46
      %p48 = scmp.ne.s32.totalorder %s34, %s35
      %p49 = scmp.eq.s32.totalorder %s27, 1
      %p50 = por %p48, %p49
      %p52 = scmp.ne.s32.totalorder %s35, %s51
      %p53 = scmp.eq.s32.totalorder %s27, 0
      %p54 = por %p52, %p53
      %s56 = sadd.s32 %s55, 1
      %p59 = scmp.eq.s32.totalorder %s21, 1
      %p60 = scmp.ne.s32.totalorder %s55, %s57
      %p61 = scmp.eq.s32.totalorder %s21, 0
      %p62 = por %p60, %p61
      %p63 = scmp.ne.s32.totalorder %s55, %s57
      %p64 = scmp.eq.s32.totalorder %s26, 1
      %p65 = por %p63, %p64
      %p66 = scmp.ne.s32.totalorder %s57, %s58
      %p67 = scmp.eq.s32.totalorder %s26, 0
      %p68 = por %p66, %p67
      %p69 = scmp.ne.s32.totalorder %s57, %s58
      %p70 = scmp.eq.s32.totalorder %s27, 1
      %p71 = por %p69, %p70
      %p73 = scmp.ne.s32.totalorder %s58, %s72
      %p74 = scmp.eq.s32.totalorder %s27, 0
      %p75 = por %p73, %p74
      %s77 = sadd.s32 %s76, 1
      %p80 = scmp.eq.s32.totalorder %s21, 1
      %p81 = scmp.ne.s32.totalorder %s76, %s78
      %p82 = scmp.eq.s32.totalorder %s21, 0
      %p83 = por %p81, %p82
      %p84 = scmp.ne.s32.totalorder %s76, %s78
      %p85 = scmp.eq.s32.totalorder %s26, 1
      %p86 = por %p84, %p85
      %p87 = scmp.ne.s32.totalorder %s78, %s79
      %p88 = scmp.eq.s32.totalorder %s26, 0
      %p89 = por %p87, %p88
      %p90 = scmp.ne.s32.totalorder %s78, %s79
      %p91 = scmp.eq.s32.totalorder %s27, 1
      %p92 = por %p90, %p91
      %p94 = scmp.ne.s32.totalorder %s79, %s93
      %p95 = scmp.eq.s32.totalorder %s27, 0
      %p96 = por %p94, %p95
      %s98 = sadd.s32 %s97, 1
      %p101 = scmp.eq.s32.totalorder %s21, 1
      %p102 = scmp.ne.s32.totalorder %s97, %s99
      %p103 = scmp.eq.s32.totalorder %s21, 0
      %p104 = por %p102, %p103
      %p105 = scmp.ne.s32.totalorder %s97, %s99
      %p106 = scmp.eq.s32.totalorder %s26, 1
      %p107 = por %p105, %p106
      %p108 = scmp.ne.s32.totalorder %s99, %s100
      %p109 = scmp.eq.s32.totalorder %s26, 0
      %p110 = por %p108, %p109
      %p111 = scmp.ne.s32.totalorder %s99, %s100
      %p112 = scmp.eq.s32.totalorder %s27, 1
      %p113 = por %p111, %p112
      %p115 = scmp.ne.s32.totalorder %s100, %s114
      %p116 = scmp.eq.s32.totalorder %s27, 0
      %p117 = por %p115, %p116
      %s119 = sadd.s32 %s118, 1
      %p122 = scmp.eq.s32.totalorder %s21, 1
      %p123 = scmp.ne.s32.totalorder %s118, %s120
      %p124 = scmp.eq.s32.totalorder %s21, 0
      %p125 = por %p123, %p124
      %p126 = scmp.ne.s32.totalorder %s118, %s120
      %p127 = scmp.eq.s32.totalorder %s26, 1
      %p128 = por %p126, %p127
      %p129 = scmp.ne.s32.totalorder %s120, %s121
      %p130 = scmp.eq.s32.totalorder %s26, 0
      %p131 = por %p129, %p130
      %p132 = scmp.ne.s32.totalorder %s120, %s121
      %p133 = scmp.eq.s32.totalorder %s27, 1
      %p134 = por %p132, %p133
      %p136 = scmp.ne.s32.totalorder %s121, %s135
      %p137 = scmp.eq.s32.totalorder %s27, 0
      %p138 = por %p136, %p137
      %s140 = sadd.s32 %s139, 1
      %p143 = scmp.eq.s32.totalorder %s21, 1
      %p144 = scmp.ne.s32.totalorder %s139, %s141
      %p145 = scmp.eq.s32.totalorder %s21, 0
      %p146 = por %p144, %p145
      %p147 = scmp.ne.s32.totalorder %s139, %s141
      %p148 = scmp.eq.s32.totalorder %s26, 1
      %p149 = por %p147, %p148
      %p150 = scmp.ne.s32.totalorder %s141, %s142
      %p151 = scmp.eq.s32.totalorder %s26, 0
      %p152 = por %p150, %p151
      %p153 = scmp.ne.s32.totalorder %s141, %s142
      %p154 = scmp.eq.s32.totalorder %s27, 1
      %p155 = por %p153, %p154
      %p157 = scmp.ne.s32.totalorder %s142, %s156
      %p158 = scmp.eq.s32.totalorder %s27, 0
      %p159 = por %p157, %p158
      %s161 = sadd.s32 %s160, 1
      %p164 = scmp.eq.s32.totalorder %s21, 1
      %p165 = scmp.ne.s32.totalorder %s160, %s162
      %p166 = scmp.eq.s32.totalorder %s21, 0
      %p167 = por %p165, %p166
      %p168 = scmp.ne.s32.totalorder %s160, %s162
      %p169 = scmp.eq.s32.totalorder %s26, 1
      %p170 = por %p168, %p169
      %p171 = scmp.ne.s32.totalorder %s162, %s163
      %p172 = scmp.eq.s32.totalorder %s26, 0
      %p173 = por %p171, %p172
      %p174 = scmp.ne.s32.totalorder %s162, %s163
      %p175 = scmp.eq.s32.totalorder %s27, 1
      %p176 = por %p174, %p175
      %p178 = scmp.ne.s32.totalorder %s163, %s177
      %p179 = scmp.eq.s32.totalorder %s27, 0
      %p180 = por %p178, %p179
      %s181 = ssub.s32 %s21, %s28
      %p182 = scmp.eq.s32.totalorder %s181, 0
      %s184 = sadd.s32 %s183, 1
      %s185 = scalar_select %p182, %s183, %s184
      %p188 = pneg %p182
      %p189 = scmp.eq.s32.totalorder %s21, 1
      %p190 = por %p188, %p189
      %p191 = scmp.ne.s32.totalorder %s183, %s186
      %p192 = scmp.eq.s32.totalorder %s21, 0
      %p193 = por %p191, %p192
      %p194 = scmp.ne.s32.totalorder %s183, %s186
      %p195 = scmp.eq.s32.totalorder %s26, 1
      %p196 = por %p194, %p195
      %p197 = scmp.ne.s32.totalorder %s186, %s187
      %p198 = scmp.eq.s32.totalorder %s26, 0
      %p199 = por %p197, %p198
      %p200 = scmp.ne.s32.totalorder %s186, %s187
      %p201 = scmp.eq.s32.totalorder %s27, 1
      %p202 = por %p200, %p201
      %p204 = scmp.ne.s32.totalorder %s187, %s203
      %p205 = scmp.eq.s32.totalorder %s27, 0
      %p206 = por %p204, %p205
      %p207 = scmp.le.s32.totalorder 1, %s21
      %p208 = scmp.lt.s32.totalorder %s21, 3
      %p209 = pnand %p207, %p208
      %p210 = pneg %p209
      // Predicated region
      $region9: #{tpu_custom_call.1} parent=5 // pred_check
        _
      $region10: #{tpu_custom_call.1} parent=5 // pred_check_branch
        %212 = sbr.rel (%p209) target = $region12
      $region11: #{tpu_custom_call.1} parent=5 // pred_region
        %s213 = ssub.s32 %s21, 1
        // Predicated region
        $region13: #{tpu_custom_call.1} parent=11 // pred_check
          %p214 = pneg %p68
        $region14: #{tpu_custom_call.1} parent=11 // pred_check_branch
          %216 = sbr.rel (%p214) target = $region16
        $region15: #{tpu_custom_call.1} parent=11 // pred_region
          %s218 = ssub.s32 1536, 1536
          %219 = vsyncadd [#allocation8], %s218
          %s220 = sshll.u32 [#allocation7], 4
          %s221 = int_to_ptr.vmem [resolvable:$true] %s220
          %226 = dma.hbm_to_vmem [thread:$0]  %s1, 1536, %s221, [#allocation8], 64, 64, 4
        $region16: #{tpu_custom_call.1} parent=11 // pred_fallthru
          _
        // Predicated region
        $region17: #{tpu_custom_call.1} parent=11 // pred_check
          %p227 = pneg %p89
        $region18: #{tpu_custom_call.1} parent=11 // pred_check_branch
          %229 = sbr.rel (%p227) target = $region20
        $region19: #{tpu_custom_call.1} parent=11 // pred_region
          _
        $region20: #{tpu_custom_call.1} parent=11 // pred_fallthru
          _
        // Predicated region
        $region21: #{tpu_custom_call.1} parent=11 // pred_check
          %p230 = pneg %p110
        $region22: #{tpu_custom_call.1} parent=11 // pred_check_branch
          %232 = sbr.rel (%p230) target = $region24
        $region23: #{tpu_custom_call.1} parent=11 // pred_region
          %s234 = ssub.s32 3072, 3072
          %235 = vsyncadd [#allocation8], %s234
          %s236 = sshll.u32 [#allocation9], 4
          %s237 = int_to_ptr.vmem [resolvable:$true] %s236
          %242 = dma.hbm_to_vmem [thread:$0]  %s3, 3072, %s237, [#allocation8], 64, 64, 4
        $region24: #{tpu_custom_call.1} parent=11 // pred_fallthru
          _
        // Predicated region
        $region25: #{tpu_custom_call.1} parent=11 // pred_check
          %p243 = pneg %p131
        $region26: #{tpu_custom_call.1} parent=11 // pred_check_branch
          %245 = sbr.rel (%p243) target = $region28
        $region27: #{tpu_custom_call.1} parent=11 // pred_region
          _
        $region28: #{tpu_custom_call.1} parent=11 // pred_fallthru
          _
        // Predicated region
        $region29: #{tpu_custom_call.1} parent=11 // pred_check
          %p246 = pneg %p152
        $region30: #{tpu_custom_call.1} parent=11 // pred_check_branch
          %248 = sbr.rel (%p246) target = $region32
        $region31: #{tpu_custom_call.1} parent=11 // pred_region
          %s250 = ssub.s32 1536, 1536
          %251 = vsyncadd [#allocation11], %s250
          %s252 = sshll.u32 [#allocation10], 4
          %s253 = int_to_ptr.vmem [resolvable:$true] %s252
          %258 = dma.hbm_to_vmem [thread:$0]  %s5, 1536, %s253, [#allocation11], 64, 64, 4
        $region32: #{tpu_custom_call.1} parent=11 // pred_fallthru
          _
        // Predicated region
        $region33: #{tpu_custom_call.1} parent=11 // pred_check
          %p259 = pneg %p173
        $region34: #{tpu_custom_call.1} parent=11 // pred_check_branch
          %261 = sbr.rel (%p259) target = $region36
        $region35: #{tpu_custom_call.1} parent=11 // pred_region
          _
        $region36: #{tpu_custom_call.1} parent=11 // pred_fallthru
          _
      $region12: #{tpu_custom_call.1} parent=5 // pred_fallthru
        _
      %p262 = scmp.lt.s32.totalorder %s21, 2
      // Predicated region
      $region37: #{tpu_custom_call.1} parent=5 // pred_check
        %p263 = pneg %p262
      $region38: #{tpu_custom_call.1} parent=5 // pred_check_branch
        %265 = sbr.rel (%p263) target = $region40
      $region39: #{tpu_custom_call.1} parent=5 // pred_region
        // Predicated region
        $region41: #{tpu_custom_call.1} parent=39 // pred_check
          %p266 = pneg %p41
        $region42: #{tpu_custom_call.1} parent=39 // pred_check_branch
          %268 = sbr.rel (%p266) target = $region44
        $region43: #{tpu_custom_call.1} parent=39 // pred_region
          %s269 = sand.u32 %s31, 1
          %s270 = scalar_lea.sflag [#allocation5], %s269
          %s271 = sand.u32 %s31, 1
          %s272 = smul.addr %s271, 16
          %s273 = scalar_lea.vmem [#allocation4], %s272
          %s275 = ssub.s32 256, 256
          %276 = vsyncadd %s270, %s275
          %s277 = smul.addr %s21, 2
          %s278 = smul.addr %s277, 128
          %s279 = scalar_lea.hbm %s0, %s278
          %s280 = sshll.u32 %s273, 4
          %s281 = int_to_ptr.vmem [resolvable:$true] %s280
          %286 = dma.hbm_to_vmem [thread:$0]  %s279, 256, %s281, %s270, 128, 128, 8
        $region44: #{tpu_custom_call.1} parent=39 // pred_fallthru
          _
      $region40: #{tpu_custom_call.1} parent=5 // pred_fallthru
        _
      %p287 = scmp.le.s32.totalorder 1, %s21
      %p288 = scmp.lt.s32.totalorder %s21, 3
      %p289 = pnand %p287, %p288
      %p290 = pneg %p289
      // Predicated region
      $region45: #{tpu_custom_call.1} parent=5 // pred_check
        _
      $region46: #{tpu_custom_call.1} parent=5 // pred_check_branch
        %292 = sbr.rel (%p289) target = $region48
      $region47: #{tpu_custom_call.1} parent=5 // pred_region
        %s293 = ssub.s32 %s21, 1
        %s294 = sand.u32 %s34, 1
        %s295 = scalar_lea.sflag [#allocation5], %s294
        %s296 = sand.u32 %s34, 1
        %s297 = smul.addr %s296, 16
        %s298 = scalar_lea.vmem [#allocation4], %s297
        // Predicated region
        $region49: #{tpu_custom_call.1} parent=47 // pred_check
          %p299 = pneg %p47
        $region50: #{tpu_custom_call.1} parent=47 // pred_check_branch
          %301 = sbr.rel (%p299) target = $region52
        $region51: #{tpu_custom_call.1} parent=47 // pred_region
          %302 = dma.done %s295, 256
        $region52: #{tpu_custom_call.1} parent=47 // pred_fallthru
          _
        // Predicated region
        $region53: #{tpu_custom_call.1} parent=47 // pred_check
          %p303 = pneg %p68
        $region54: #{tpu_custom_call.1} parent=47 // pred_check_branch
          %305 = sbr.rel (%p303) target = $region56
        $region55: #{tpu_custom_call.1} parent=47 // pred_region
          %306 = dma.done [#allocation8], 1536
        $region56: #{tpu_custom_call.1} parent=47 // pred_fallthru
          _
        // Predicated region
        $region57: #{tpu_custom_call.1} parent=47 // pred_check
          %p307 = pneg %p110
        $region58: #{tpu_custom_call.1} parent=47 // pred_check_branch
          %309 = sbr.rel (%p307) target = $region60
        $region59: #{tpu_custom_call.1} parent=47 // pred_region
          %310 = dma.done [#allocation8], 3072
        $region60: #{tpu_custom_call.1} parent=47 // pred_fallthru
          _
        // Predicated region
        $region61: #{tpu_custom_call.1} parent=47 // pred_check
          %p311 = pneg %p152
        $region62: #{tpu_custom_call.1} parent=47 // pred_check_branch
          %313 = sbr.rel (%p311) target = $region64
        $region63: #{tpu_custom_call.1} parent=47 // pred_region
          %314 = dma.done [#allocation11], 1536
        $region64: #{tpu_custom_call.1} parent=47 // pred_fallthru
          _
        %s315 = sand.u32 %s34, 1
        %s316 = scalar_lea.sflag [#allocation5], %s315
        %s317 = sand.u32 %s34, 1
        %s318 = smul.addr %s317, 16
        %s319 = scalar_lea.vmem [#allocation4], %s318
        %p320 = pneg %p47
        %p321 = pneg %p44
        %p322 = pneg %p68
        %p323 = pneg %p65
        %p324 = pneg %p89
        %p325 = pneg %p86
        %p326 = pneg %p110
        %p327 = pneg %p107
        %p328 = pneg %p131
        %p329 = pneg %p128
        %p330 = pneg %p152
        %p331 = pneg %p149
        %p332 = pneg %p173
        %p333 = pneg %p170
        %p334 = pneg %p199
        %p335 = pneg %p196
        %s336 = sand.u32 %s186, 1
        %s337 = scalar_lea.sflag [#allocation6], %s336
        %s338 = sand.u32 %s186, 1
        %s339 = smul.addr %s338, 16
        %s340 = scalar_lea.vmem [#allocation12], %s339
        %v342 = vld [vmem:[%s298] sm:$0xff]
        %v343 = vld [vmem:[%s298 + $0x8] sm:$0xff]
        %vm344 = vcmask 516096
        %vm345 = vsmask.f32 256
        %vm346 = vmand %vm344, %vm345
        %v347 = vld [vmem:[#allocation2] sm:$0x1]
        %v348 = vsel %vm346, 0, %v347
        %349 = vst [vmem:[#allocation2] sm:$0x1] %v348
        %vm350 = vsmask.f32 7938
        %vm351 = vmand %vm344, %vm350
        %v352 = vld [vmem:[#allocation2 + $0x8] sm:$0x1]
        %v353 = vsel %vm351, 0, %v352
        %354 = vst [vmem:[#allocation2 + $0x8] sm:$0x1] %v353
        %v355 = vpack.c.bf16 %v343, %v342
        %v357 = vunpack.c.l.b16 %v355
        %v358 = vunpack.c.h.b16 %v355
        %v359 = vpack.c.b16 %v357, %v357
        %v360 = vpack.c.b16 %v358, %v358
        %vm361 = vsmask.f32 4368
        %vm362 = vmor %vm345, %vm361
        %v364 = vshrl.u32 %v359, 16
        %v366 = vrot.slane %v364, 7
        %v367 = vshll.u32 %v359, 16
        %v369 = vor.u32 %v366, %v367
        %v370 = vrot.slane %v366, 4
        %v372 = vshrl.u32 %v360, 16
        %v374 = vrot.slane %v372, 7
        %v375 = vshll.u32 %v360, 16
        %v377 = vor.u32 %v374, %v375
        %v378 = vsel %vm362, %v370, %v377
        %v379 = vrot.slane %v374, 4
        %vm383 = vcmask 519168
        %vm384 = vmand %vm383, %vm350
        %v385 = vld [vmem:[#allocation2] sm:$0xf]
        %v386 = vsel %vm384, %v369, %v385
        %387 = vst [vmem:[#allocation2] sm:$0xf] %v386
        %vm388 = vcmask 519168
        %389 = vst.msk [vmem:[#allocation2 + $0x4] sm:$0xf] %vm388, %v378
        %v390 = vld [vmem:[#allocation2 + $0x8] sm:$0x1]
        %v391 = vsel %vm346, %v379, %v390
        %392 = vst [vmem:[#allocation2 + $0x8] sm:$0x1] %v391
        %v393 = vld [vmem:[#allocation2] sm:$0xf]
        %v394 = vld [vmem:[#allocation2 + $0x4] sm:$0xf]
        %v395 = vld [vmem:[#allocation2 + $0x8] sm:$0x1]
        %v396 = vld [vmem:[#allocation2] sm:$0xe]
        %v399 = vunpack.c.l.b16 %v393
        %v400 = vunpack.c.l.b16 %v394
        %v401 = vpack.c.b16 %v400, %v399
        %v403 = vunpack.c.l.b16 %v395
        %v404 = vpack.c.b16 %v403, %v403
        %vm405 = vsmask.f32 7424
        %v407 = vshrl.u32 %v401, 16
        %v409 = vshll.u32 %v401, 16
        %v411 = vrot.slane %v409, 1
        %v412 = vor.u32 %v407, %v411
        %v414 = vshll.u32 %v404, 16
        %v416 = vrot.slane %v414, 1
        %v417 = vsel %vm405, %v412, %v416
        %418 = vrot.lane.b32.xlu0 %v417, 64
        %v419 = vpop.permute.xlu0 %418
        %v421 = vunpack.c.l.b16 %v396
        %v422 = vpack.c.b16 %v400, %v421
        %vm423 = vcmask 1046528
        %v424 = vrot.slane %v422, 1
        %v425 = vrot.slane %v404, 1
        %v426 = vsel %vm423, %v424, %v425
        %vm427 = vcmask 523264
        %v429 = vsel %vm427, %v401, %v419
        %v431 = vld [vmem:[#allocation7] sm:$0xf]
        %v432 = vld [vmem:[#allocation7 + $0x4] sm:$0xf]
        %v433 = vld [vmem:[#allocation7 + $0x8] sm:$0xf]
        %v434 = vld [vmem:[#allocation7 + $0xc] sm:$0xf]
        %v435 = vld [vmem:[#allocation7 + $0x10] sm:$0xf]
        %v436 = vld [vmem:[#allocation7 + $0x14] sm:$0xf]
        %v437 = vld [vmem:[#allocation7 + $0x18] sm:$0xf]
        %v438 = vld [vmem:[#allocation7 + $0x1c] sm:$0xf]
        %v439 = vld [vmem:[#allocation7 + $0x20] sm:$0xf]
        %v440 = vld [vmem:[#allocation7 + $0x24] sm:$0xf]
        %v441 = vld [vmem:[#allocation7 + $0x28] sm:$0xf]
        %v442 = vld [vmem:[#allocation7 + $0x2c] sm:$0xf]
        %v443 = vld [vmem:[#allocation7 + $0x30] sm:$0xf]
        %v444 = vld [vmem:[#allocation7 + $0x34] sm:$0xf]
        %v445 = vld [vmem:[#allocation7 + $0x38] sm:$0xf]
        %v446 = vld [vmem:[#allocation7 + $0x3c] sm:$0xf]
        %v447 = vld [vmem:[#allocation7 + $0x40] sm:$0xf]
        %v448 = vld [vmem:[#allocation7 + $0x44] sm:$0xf]
        %v449 = vld [vmem:[#allocation7 + $0x48] sm:$0xf]
        %v450 = vld [vmem:[#allocation7 + $0x4c] sm:$0xf]
        %v451 = vld [vmem:[#allocation7 + $0x50] sm:$0xf]
        %v452 = vld [vmem:[#allocation7 + $0x54] sm:$0xf]
        %v453 = vld [vmem:[#allocation7 + $0x58] sm:$0xf]
        %v454 = vld [vmem:[#allocation7 + $0x5c] sm:$0xf]
        %v455 = vld [vmem:[%s2] sm:$0x1]
        %v457 = vlaneseq
        %v458 = vshrl.u32 %v457, 7
        %v459 = vsub.s32 0, %v458
        %v460 = vrot.slane %v455, %v459
        %v486 = vunpack.c.l.b16 %v431
        %v487 = vunpack.c.l.b16 %v432
        %v488 = vunpack.c.l.b16 %v433
        %v489 = vunpack.c.l.b16 %v434
        %v490 = vunpack.c.l.b16 %v435
        %v491 = vunpack.c.l.b16 %v436
        %v492 = vunpack.c.l.b16 %v437
        %v493 = vunpack.c.l.b16 %v438
        %v494 = vunpack.c.l.b16 %v439
        %v495 = vunpack.c.l.b16 %v440
        %v496 = vunpack.c.l.b16 %v441
        %v497 = vunpack.c.l.b16 %v442
        %v498 = vunpack.c.l.b16 %v443
        %v499 = vunpack.c.l.b16 %v444
        %v500 = vunpack.c.l.b16 %v445
        %v501 = vunpack.c.l.b16 %v446
        %v502 = vunpack.c.l.b16 %v447
        %v503 = vunpack.c.l.b16 %v448
        %v504 = vunpack.c.l.b16 %v449
        %v505 = vunpack.c.l.b16 %v450
        %v506 = vunpack.c.l.b16 %v451
        %v507 = vunpack.c.l.b16 %v452
        %v508 = vunpack.c.l.b16 %v453
        %v509 = vunpack.c.l.b16 %v454
        %v510 = vpack.c.b16 %v487, %v486
        %v511 = vpack.c.b16 %v489, %v488
        %v512 = vpack.c.b16 %v491, %v490
        %v513 = vpack.c.b16 %v493, %v492
        %v514 = vpack.c.b16 %v495, %v494
        %v515 = vpack.c.b16 %v497, %v496
        %v516 = vpack.c.b16 %v499, %v498
        %v517 = vpack.c.b16 %v501, %v500
        %v518 = vpack.c.b16 %v503, %v502
        %v519 = vpack.c.b16 %v505, %v504
        %v520 = vpack.c.b16 %v507, %v506
        %v521 = vpack.c.b16 %v509, %v508
        %v535 = vsel %vm427, %v426, 0
        %537 = vmatprep.subr.bf16.mxu0 0
        %538 = vmatpush1.bf16.msra.mxu0 %v510
        %539 = vmatprep.subr.bf16.mxu0 0
        %540 = vmatpush1.bf16.msra.mxu0 %v511
        %541 = vmatprep.subr.bf16.mxu0 0
        %542 = vmatpush1.bf16.msra.mxu0 %v512
        %543 = vmatprep.subr.bf16.mxu0 0
        %544 = vmatpush1.bf16.msra.mxu0 %v513
        %545 = vmatprep.subr.bf16.mxu0 0
        %546 = vmatpush1.bf16.msra.mxu0 %v514
        %547 = vmatprep.subr.bf16.mxu0 0
        %548 = vmatpush1.bf16.msra.mxu0 %v515
        %549 = vmatprep.subr.bf16.mxu0 0
        %550 = vmatpush1.bf16.msra.mxu0 %v516
        %551 = vmatprep.subr.bf16.mxu0 0
        %552 = vmatpush1.bf16.msra.mxu0 %v517
        %553 = vmatprep.subr.bf16.mxu0 0
        %554 = vmatpush1.bf16.msra.mxu0 %v518
        %555 = vmatprep.subr.bf16.mxu0 0
        %556 = vmatpush1.bf16.msra.mxu0 %v519
        %557 = vmatprep.subr.bf16.mxu0 0
        %558 = vmatpush1.bf16.msra.mxu0 %v520
        %559 = vmatprep.subr.bf16.mxu0 0
        %560 = vmatpush1.bf16.msra.mxu0 %v521
        %561 = vmatprep.subr.bf16.mxu0 0
        %562 = vmatpush1.bf16.msra.mxu0 0
        %563 = vmatprep.subr.bf16.mxu0 0
        %564 = vmatpush1.bf16.msra.mxu0 0
        %565 = vmatprep.subr.bf16.mxu0 0
        %566 = vmatpush1.bf16.msra.mxu0 0
        %567 = vmatprep.subr.bf16.mxu0 0
        %568 = vmatpush1.bf16.msra.mxu0 0
        %569 = vmatprep.mubr.bf16.mxu0 %v535
        %570 = vmatmul.mubr.bf16.gmra.mrb[0].mxu0 %v429
        %v571 = vpop.f32.mrb[0].mxu0
        %v572 = vadd.f32 %v460, %v571
        %v573 = vpop.f32.mrb[0].mxu0
        %v574 = vpop.f32.mrb[0].mxu0
        %v575 = vadd.f32 %v460, %v574
        %v576 = vpop.f32.mrb[0].mxu0
        %577 = vdwg.mxu0
        %v578 = vmax.f32 %v572, 0.0
        %v579 = vmax.f32 %v575, 0.0
        %v580 = vld [vmem:[#allocation10] sm:$0xf]
        %v581 = vld [vmem:[#allocation10 + $0x4] sm:$0xf]
        %v582 = vld [vmem:[#allocation10 + $0x8] sm:$0xf]
        %v583 = vld [vmem:[#allocation10 + $0xc] sm:$0xf]
        %v584 = vld [vmem:[#allocation10 + $0x10] sm:$0xf]
        %v585 = vld [vmem:[#allocation10 + $0x14] sm:$0xf]
        %v586 = vld [vmem:[#allocation10 + $0x18] sm:$0xf]
        %v587 = vld [vmem:[#allocation10 + $0x1c] sm:$0xf]
        %v588 = vld [vmem:[#allocation10 + $0x20] sm:$0xf]
        %v589 = vld [vmem:[#allocation10 + $0x24] sm:$0xf]
        %v590 = vld [vmem:[#allocation10 + $0x28] sm:$0xf]
        %v591 = vld [vmem:[#allocation10 + $0x2c] sm:$0xf]
        %v592 = vld [vmem:[#allocation10 + $0x30] sm:$0xf]
        %v593 = vld [vmem:[#allocation10 + $0x34] sm:$0xf]
        %v594 = vld [vmem:[#allocation10 + $0x38] sm:$0xf]
        %v595 = vld [vmem:[#allocation10 + $0x3c] sm:$0xf]
        %v596 = vld [vmem:[#allocation10 + $0x40] sm:$0xf]
        %v597 = vld [vmem:[#allocation10 + $0x44] sm:$0xf]
        %v598 = vld [vmem:[#allocation10 + $0x48] sm:$0xf]
        %v599 = vld [vmem:[#allocation10 + $0x4c] sm:$0xf]
        %v600 = vld [vmem:[#allocation10 + $0x50] sm:$0xf]
        %v601 = vld [vmem:[#allocation10 + $0x54] sm:$0xf]
        %v602 = vld [vmem:[#allocation10 + $0x58] sm:$0xf]
        %v603 = vld [vmem:[#allocation10 + $0x5c] sm:$0xf]
        %v604 = vld [vmem:[%s6] sm:$0x1]
        %v606 = vlaneseq
        %v607 = vshrl.u32 %v606, 7
        %v608 = vsub.s32 0, %v607
        %v609 = vrot.slane %v604, %v608
        %v635 = vunpack.c.l.b16 %v580
        %v636 = vunpack.c.l.b16 %v581
        %v637 = vunpack.c.l.b16 %v582
        %v638 = vunpack.c.l.b16 %v583
        %v639 = vunpack.c.l.b16 %v584
        %v640 = vunpack.c.l.b16 %v585
        %v641 = vunpack.c.l.b16 %v586
        %v642 = vunpack.c.l.b16 %v587
        %v643 = vunpack.c.l.b16 %v588
        %v644 = vunpack.c.l.b16 %v589
        %v645 = vunpack.c.l.b16 %v590
        %v646 = vunpack.c.l.b16 %v591
        %v647 = vunpack.c.l.b16 %v592
        %v648 = vunpack.c.l.b16 %v593
        %v649 = vunpack.c.l.b16 %v594
        %v650 = vunpack.c.l.b16 %v595
        %v651 = vunpack.c.l.b16 %v596
        %v652 = vunpack.c.l.b16 %v597
        %v653 = vunpack.c.l.b16 %v598
        %v654 = vunpack.c.l.b16 %v599
        %v655 = vunpack.c.l.b16 %v600
        %v656 = vunpack.c.l.b16 %v601
        %v657 = vunpack.c.l.b16 %v602
        %v658 = vunpack.c.l.b16 %v603
        %v659 = vpack.c.b16 %v636, %v635
        %v660 = vpack.c.b16 %v638, %v637
        %v661 = vpack.c.b16 %v640, %v639
        %v662 = vpack.c.b16 %v642, %v641
        %v663 = vpack.c.b16 %v644, %v643
        %v664 = vpack.c.b16 %v646, %v645
        %v665 = vpack.c.b16 %v648, %v647
        %v666 = vpack.c.b16 %v650, %v649
        %v667 = vpack.c.b16 %v652, %v651
        %v668 = vpack.c.b16 %v654, %v653
        %v669 = vpack.c.b16 %v656, %v655
        %v670 = vpack.c.b16 %v658, %v657
        %683 = vmatprep.subr.bf16.mxu0 0
        %684 = vmatpush1.bf16.msra.mxu0 %v659
        %685 = vmatprep.subr.bf16.mxu0 0
        %686 = vmatpush1.bf16.msra.mxu0 %v660
        %687 = vmatprep.subr.bf16.mxu0 0
        %688 = vmatpush1.bf16.msra.mxu0 %v661
        %689 = vmatprep.subr.bf16.mxu0 0
        %690 = vmatpush1.bf16.msra.mxu0 %v662
        %691 = vmatprep.subr.bf16.mxu0 0
        %692 = vmatpush1.bf16.msra.mxu0 %v663
        %693 = vmatprep.subr.bf16.mxu0 0
        %694 = vmatpush1.bf16.msra.mxu0 %v664
        %695 = vmatprep.subr.bf16.mxu0 0
        %696 = vmatpush1.bf16.msra.mxu0 %v665
        %697 = vmatprep.subr.bf16.mxu0 0
        %698 = vmatpush1.bf16.msra.mxu0 %v666
        %699 = vmatprep.subr.bf16.mxu0 0
        %700 = vmatpush1.bf16.msra.mxu0 %v667
        %701 = vmatprep.subr.bf16.mxu0 0
        %702 = vmatpush1.bf16.msra.mxu0 %v668
        %703 = vmatprep.subr.bf16.mxu0 0
        %704 = vmatpush1.bf16.msra.mxu0 %v669
        %705 = vmatprep.subr.bf16.mxu0 0
        %706 = vmatpush1.bf16.msra.mxu0 %v670
        %707 = vmatprep.subr.bf16.mxu0 0
        %708 = vmatpush1.bf16.msra.mxu0 0
        %709 = vmatprep.subr.bf16.mxu0 0
        %710 = vmatpush1.bf16.msra.mxu0 0
        %711 = vmatprep.subr.bf16.mxu0 0
        %712 = vmatpush1.bf16.msra.mxu0 0
        %713 = vmatprep.subr.bf16.mxu0 0
        %714 = vmatpush1.bf16.msra.mxu0 0
        %715 = vmatprep.mubr.bf16.mxu0 %v535
        %716 = vmatmul.mubr.bf16.gmra.mrb[0].mxu0 %v429
        %v717 = vpop.f32.mrb[0].mxu0
        %v718 = vadd.f32 %v609, %v717
        %v719 = vpop.f32.mrb[0].mxu0
        %v720 = vpop.f32.mrb[0].mxu0
        %v721 = vadd.f32 %v609, %v720
        %v722 = vpop.f32.mrb[0].mxu0
        %723 = vdwg.mxu0
        %vm724 = vcmask 1040384
        %vm725 = vmand %vm724, %vm345
        %v726 = vld [vmem:[#allocation3] sm:$0x1]
        %v727 = vsel %vm725, 0, %v726
        %728 = vst [vmem:[#allocation3] sm:$0x1] %v727
        %vm729 = vmand %vm724, %vm350
        %v730 = vld [vmem:[#allocation3 + $0x8] sm:$0x1]
        %v731 = vsel %vm729, 0, %v730
        %732 = vst [vmem:[#allocation3 + $0x8] sm:$0x1] %v731
        %v733 = vpack.c.bf16 %v579, %v578
        %v735 = vunpack.c.l.b16 %v733
        %v736 = vunpack.c.h.b16 %v733
        %v737 = vpack.c.b16 %v735, %v735
        %v738 = vpack.c.b16 %v736, %v736
        %v740 = vshrl.u32 %v737, 16
        %v742 = vrot.slane %v740, 7
        %v743 = vshll.u32 %v737, 16
        %v745 = vor.u32 %v742, %v743
        %v746 = vrot.slane %v742, 4
        %v748 = vshrl.u32 %v738, 16
        %v750 = vrot.slane %v748, 7
        %v751 = vshll.u32 %v738, 16
        %v753 = vor.u32 %v750, %v751
        %v754 = vsel %vm362, %v746, %v753
        %v755 = vrot.slane %v750, 4
        %vm759 = vcmask 1043456
        %vm760 = vmand %vm759, %vm350
        %v761 = vld [vmem:[#allocation3] sm:$0xf]
        %v762 = vsel %vm760, %v745, %v761
        %763 = vst [vmem:[#allocation3] sm:$0xf] %v762
        %764 = vst [vmem:[#allocation3 + $0x4] sm:$0xf] %v754
        %v765 = vld [vmem:[#allocation3 + $0x8] sm:$0x1]
        %v766 = vsel %vm725, %v755, %v765
        %767 = vst [vmem:[#allocation3 + $0x8] sm:$0x1] %v766
        %v768 = vld [vmem:[#allocation3] sm:$0xf]
        %v769 = vld [vmem:[#allocation3 + $0x4] sm:$0xf]
        %v770 = vld [vmem:[#allocation3 + $0x8] sm:$0x1]
        %v771 = vld [vmem:[#allocation3] sm:$0xe]
        %v774 = vunpack.c.l.b16 %v768
        %v775 = vunpack.c.l.b16 %v769
        %v776 = vpack.c.b16 %v775, %v774
        %v779 = vunpack.c.l.b16 %v770
        %v780 = vpack.c.b16 %v779, %v779
        %v782 = vshrl.u32 %v776, 16
        %v784 = vshll.u32 %v776, 16
        %v786 = vrot.slane %v784, 1
        %v787 = vor.u32 %v782, %v786
        %v789 = vshll.u32 %v780, 16
        %v791 = vrot.slane %v789, 1
        %v792 = vsel %vm405, %v787, %v791
        %v795 = vunpack.c.l.b16 %v771
        %v796 = vpack.c.b16 %v775, %v795
        %v797 = vrot.slane %v796, 1
        %v798 = vrot.slane %v780, 1
        %v799 = vsel %vm423, %v797, %v798
        %v801 = vld [vmem:[#allocation9] sm:$0xf]
        %v802 = vld [vmem:[#allocation9 + $0x4] sm:$0xf]
        %v803 = vld [vmem:[#allocation9 + $0x8] sm:$0xf]
        %v804 = vld [vmem:[#allocation9 + $0xc] sm:$0xf]
        %v805 = vld [vmem:[#allocation9 + $0x10] sm:$0xf]
        %v806 = vld [vmem:[#allocation9 + $0x14] sm:$0xf]
        %v807 = vld [vmem:[#allocation9 + $0x18] sm:$0xf]
        %v808 = vld [vmem:[#allocation9 + $0x1c] sm:$0xf]
        %v809 = vld [vmem:[#allocation9 + $0x20] sm:$0xf]
        %v810 = vld [vmem:[#allocation9 + $0x24] sm:$0xf]
        %v811 = vld [vmem:[#allocation9 + $0x28] sm:$0xf]
        %v812 = vld [vmem:[#allocation9 + $0x2c] sm:$0xf]
        %v813 = vld [vmem:[#allocation9 + $0x30] sm:$0xf]
        %v814 = vld [vmem:[#allocation9 + $0x34] sm:$0xf]
        %v815 = vld [vmem:[#allocation9 + $0x38] sm:$0xf]
        %v816 = vld [vmem:[#allocation9 + $0x3c] sm:$0xf]
        %v817 = vld [vmem:[#allocation9 + $0x40] sm:$0xf]
        %v818 = vld [vmem:[#allocation9 + $0x44] sm:$0xf]
        %v819 = vld [vmem:[#allocation9 + $0x48] sm:$0xf]
        %v820 = vld [vmem:[#allocation9 + $0x4c] sm:$0xf]
        %v821 = vld [vmem:[#allocation9 + $0x50] sm:$0xf]
        %v822 = vld [vmem:[#allocation9 + $0x54] sm:$0xf]
        %v823 = vld [vmem:[#allocation9 + $0x58] sm:$0xf]
        %v824 = vld [vmem:[#allocation9 + $0x5c] sm:$0xf]
        %v825 = vld [vmem:[#allocation9 + $0x60] sm:$0xf]
        %v826 = vld [vmem:[#allocation9 + $0x64] sm:$0xf]
        %v827 = vld [vmem:[#allocation9 + $0x68] sm:$0xf]
        %v828 = vld [vmem:[#allocation9 + $0x6c] sm:$0xf]
        %v829 = vld [vmem:[#allocation9 + $0x70] sm:$0xf]
        %v830 = vld [vmem:[#allocation9 + $0x74] sm:$0xf]
        %v831 = vld [vmem:[#allocation9 + $0x78] sm:$0xf]
        %v832 = vld [vmem:[#allocation9 + $0x7c] sm:$0xf]
        %v833 = vld [vmem:[#allocation9 + $0x80] sm:$0xf]
        %v834 = vld [vmem:[#allocation9 + $0x84] sm:$0xf]
        %v835 = vld [vmem:[#allocation9 + $0x88] sm:$0xf]
        %v836 = vld [vmem:[#allocation9 + $0x8c] sm:$0xf]
        %v837 = vld [vmem:[#allocation9 + $0x90] sm:$0xf]
        %v838 = vld [vmem:[#allocation9 + $0x94] sm:$0xf]
        %v839 = vld [vmem:[#allocation9 + $0x98] sm:$0xf]
        %v840 = vld [vmem:[#allocation9 + $0x9c] sm:$0xf]
        %v841 = vld [vmem:[#allocation9 + $0xa0] sm:$0xf]
        %v842 = vld [vmem:[#allocation9 + $0xa4] sm:$0xf]
        %v843 = vld [vmem:[#allocation9 + $0xa8] sm:$0xf]
        %v844 = vld [vmem:[#allocation9 + $0xac] sm:$0xf]
        %v845 = vld [vmem:[#allocation9 + $0xb0] sm:$0xf]
        %v846 = vld [vmem:[#allocation9 + $0xb4] sm:$0xf]
        %v847 = vld [vmem:[#allocation9 + $0xb8] sm:$0xf]
        %v848 = vld [vmem:[#allocation9 + $0xbc] sm:$0xf]
        %v849 = vld [vmem:[%s4] sm:$0x1]
        %v851 = vlaneseq
        %v852 = vshrl.u32 %v851, 7
        %v853 = vsub.s32 0, %v852
        %v854 = vrot.slane %v849, %v853
        %v904 = vunpack.c.l.b16 %v801
        %v905 = vunpack.c.l.b16 %v802
        %v906 = vunpack.c.l.b16 %v803
        %v907 = vunpack.c.l.b16 %v804
        %v908 = vunpack.c.l.b16 %v805
        %v909 = vunpack.c.l.b16 %v806
        %v910 = vunpack.c.l.b16 %v807
        %v911 = vunpack.c.l.b16 %v808
        %v912 = vunpack.c.l.b16 %v809
        %v913 = vunpack.c.l.b16 %v810
        %v914 = vunpack.c.l.b16 %v811
        %v915 = vunpack.c.l.b16 %v812
        %v916 = vunpack.c.l.b16 %v813
        %v917 = vunpack.c.l.b16 %v814
        %v918 = vunpack.c.l.b16 %v815
        %v919 = vunpack.c.l.b16 %v816
        %v920 = vunpack.c.l.b16 %v817
        %v921 = vunpack.c.l.b16 %v818
        %v922 = vunpack.c.l.b16 %v819
        %v923 = vunpack.c.l.b16 %v820
        %v924 = vunpack.c.l.b16 %v821
        %v925 = vunpack.c.l.b16 %v822
        %v926 = vunpack.c.l.b16 %v823
        %v927 = vunpack.c.l.b16 %v824
        %v928 = vunpack.c.l.b16 %v825
        %v929 = vunpack.c.l.b16 %v826
        %v930 = vunpack.c.l.b16 %v827
        %v931 = vunpack.c.l.b16 %v828
        %v932 = vunpack.c.l.b16 %v829
        %v933 = vunpack.c.l.b16 %v830
        %v934 = vunpack.c.l.b16 %v831
        %v935 = vunpack.c.l.b16 %v832
        %v936 = vunpack.c.l.b16 %v833
        %v937 = vunpack.c.l.b16 %v834
        %v938 = vunpack.c.l.b16 %v835
        %v939 = vunpack.c.l.b16 %v836
        %v940 = vunpack.c.l.b16 %v837
        %v941 = vunpack.c.l.b16 %v838
        %v942 = vunpack.c.l.b16 %v839
        %v943 = vunpack.c.l.b16 %v840
        %v944 = vunpack.c.l.b16 %v841
        %v945 = vunpack.c.l.b16 %v842
        %v946 = vunpack.c.l.b16 %v843
        %v947 = vunpack.c.l.b16 %v844
        %v948 = vunpack.c.l.b16 %v845
        %v949 = vunpack.c.l.b16 %v846
        %v950 = vunpack.c.l.b16 %v847
        %v951 = vunpack.c.l.b16 %v848
        %v952 = vpack.c.b16 %v905, %v904
        %v953 = vpack.c.b16 %v907, %v906
        %v954 = vpack.c.b16 %v909, %v908
        %v955 = vpack.c.b16 %v911, %v910
        %v956 = vpack.c.b16 %v913, %v912
        %v957 = vpack.c.b16 %v915, %v914
        %v958 = vpack.c.b16 %v917, %v916
        %v959 = vpack.c.b16 %v919, %v918
        %v960 = vpack.c.b16 %v921, %v920
        %v961 = vpack.c.b16 %v923, %v922
        %v962 = vpack.c.b16 %v925, %v924
        %v963 = vpack.c.b16 %v927, %v926
        %v964 = vpack.c.b16 %v929, %v928
        %v965 = vpack.c.b16 %v931, %v930
        %v966 = vpack.c.b16 %v933, %v932
        %v967 = vpack.c.b16 %v935, %v934
        %v968 = vpack.c.b16 %v937, %v936
        %v969 = vpack.c.b16 %v939, %v938
        %v970 = vpack.c.b16 %v941, %v940
        %v971 = vpack.c.b16 %v943, %v942
        %v972 = vpack.c.b16 %v945, %v944
        %v973 = vpack.c.b16 %v947, %v946
        %v974 = vpack.c.b16 %v949, %v948
        %v975 = vpack.c.b16 %v951, %v950
        %1000 = vmatprep.subr.bf16.mxu0 0
        %1001 = vmatpush1.bf16.msra.mxu0 %v952
        %1002 = vmatprep.subr.bf16.mxu0 0
        %1003 = vmatpush1.bf16.msra.mxu0 %v953
        %1004 = vmatprep.subr.bf16.mxu0 0
        %1005 = vmatpush1.bf16.msra.mxu0 %v954
        %1006 = vmatprep.subr.bf16.mxu0 0
        %1007 = vmatpush1.bf16.msra.mxu0 %v955
        %1008 = vmatprep.subr.bf16.mxu0 0
        %1009 = vmatpush1.bf16.msra.mxu0 %v956
        %1010 = vmatprep.subr.bf16.mxu0 0
        %1011 = vmatpush1.bf16.msra.mxu0 %v957
        %1012 = vmatprep.subr.bf16.mxu0 0
        %1013 = vmatpush1.bf16.msra.mxu0 %v958
        %1014 = vmatprep.subr.bf16.mxu0 0
        %1015 = vmatpush1.bf16.msra.mxu0 %v959
        %1016 = vmatprep.subr.bf16.mxu0 0
        %1017 = vmatpush1.bf16.msra.mxu0 %v960
        %1018 = vmatprep.subr.bf16.mxu0 0
        %1019 = vmatpush1.bf16.msra.mxu0 %v961
        %1020 = vmatprep.subr.bf16.mxu0 0
        %1021 = vmatpush1.bf16.msra.mxu0 %v962
        %1022 = vmatprep.subr.bf16.mxu0 0
        %1023 = vmatpush1.bf16.msra.mxu0 %v963
        %1024 = vmatprep.subr.bf16.mxu0 0
        %1025 = vmatpush1.bf16.msra.mxu0 %v964
        %1026 = vmatprep.subr.bf16.mxu0 0
        %1027 = vmatpush1.bf16.msra.mxu0 %v965
        %1028 = vmatprep.subr.bf16.mxu0 0
        %1029 = vmatpush1.bf16.msra.mxu0 %v966
        %1030 = vmatprep.subr.bf16.mxu0 0
        %1031 = vmatpush1.bf16.msra.mxu0 %v967
        %1032 = vmatprep.mubr.bf16.mxu0 %v792
        %1033 = vmatmul.mubr.bf16.gmra.mrb[0].mxu0 %v776
        %v1034 = vpop.f32.mrb[0].mxu0
        %v1035 = vadd.f32 %v854, %v1034
        %v1036 = vpop.f32.mrb[0].mxu0
        %v1037 = vpop.f32.mrb[0].mxu0
        %v1038 = vadd.f32 %v854, %v1037
        %v1039 = vpop.f32.mrb[0].mxu0
        %1040 = vdwg.mxu0
        %1041 = vmatprep.subr.bf16.mxu0 0
        %1042 = vmatpush1.bf16.msra.mxu0 %v968
        %1043 = vmatprep.subr.bf16.mxu0 0
        %1044 = vmatpush1.bf16.msra.mxu0 %v969
        %1045 = vmatprep.subr.bf16.mxu0 0
        %1046 = vmatpush1.bf16.msra.mxu0 %v970
        %1047 = vmatprep.subr.bf16.mxu0 0
        %1048 = vmatpush1.bf16.msra.mxu0 %v971
        %1049 = vmatprep.subr.bf16.mxu0 0
        %1050 = vmatpush1.bf16.msra.mxu0 %v972
        %1051 = vmatprep.subr.bf16.mxu0 0
        %1052 = vmatpush1.bf16.msra.mxu0 %v973
        %1053 = vmatprep.subr.bf16.mxu0 0
        %1054 = vmatpush1.bf16.msra.mxu0 %v974
        %1055 = vmatprep.subr.bf16.mxu0 0
        %1056 = vmatpush1.bf16.msra.mxu0 %v975
        %1057 = vmatprep.subr.bf16.mxu0 0
        %1058 = vmatpush1.bf16.msra.mxu0 0
        %1059 = vmatprep.subr.bf16.mxu0 0
        %1060 = vmatpush1.bf16.msra.mxu0 0
        %1061 = vmatprep.subr.bf16.mxu0 0
        %1062 = vmatpush1.bf16.msra.mxu0 0
        %1063 = vmatprep.subr.bf16.mxu0 0
        %1064 = vmatpush1.bf16.msra.mxu0 0
        %1065 = vmatprep.subr.bf16.mxu0 0
        %1066 = vmatpush1.bf16.msra.mxu0 0
        %1067 = vmatprep.subr.bf16.mxu0 0
        %1068 = vmatpush1.bf16.msra.mxu0 0
        %1069 = vmatprep.subr.bf16.mxu0 0
        %1070 = vmatpush1.bf16.msra.mxu0 0
        %1071 = vmatprep.subr.bf16.mxu0 0
        %1072 = vmatpush1.bf16.msra.mxu0 0
        %1073 = vmatprep.mubr.bf16.mxu0 0
        %1074 = vmatmul.mubr.bf16.gmra.mrb[0].mxu0 %v799
        %v1075 = vpop.f32.mrb[0].mxu0
        %v1076 = vadd.f32 %v1035, %v1075
        %v1077 = vpop.f32.mrb[0].mxu0
        %v1078 = vpop.f32.mrb[0].mxu0
        %v1079 = vadd.f32 %v1038, %v1078
        %v1080 = vpop.f32.mrb[0].mxu0
        %1081 = vdwg.mxu0
        %v1082 = vadd.f32 %v1076, %v718
        %v1083 = vadd.f32 %v1079, %v721
        %v1084 = vmax.f32 %v1082, 0.0
        %v1085 = vmax.f32 %v1083, 0.0
        %1086 = vst [vmem:[%s340] sm:$0xff] %v1084
        %1087 = vst [vmem:[%s340 + $0x8] sm:$0xff] %v1085
        %s1088 = sand.u32 %s186, 1
        %s1089 = scalar_lea.sflag [#allocation6], %s1088
        %s1090 = sand.u32 %s186, 1
        %s1091 = smul.addr %s1090, 16
        %s1092 = scalar_lea.vmem [#allocation12], %s1091
        // Predicated region
        $region65: #{tpu_custom_call.1} parent=47 // pred_check
          %p1093 = pneg %p196
        $region66: #{tpu_custom_call.1} parent=47 // pred_check_branch
          %1095 = sbr.rel (%p1093) target = $region68
        $region67: #{tpu_custom_call.1} parent=47 // pred_region
          %s1097 = ssub.s32 256, 256
          %1098 = vsyncadd %s1089, %s1097
          %s1099 = smul.addr %s26, 2
          %s1100 = smul.addr %s1099, 128
          %s1101 = scalar_lea.hbm %s7, %s1100
          %s1102 = sshll.u32 %s1092, 4
          %s1103 = int_to_ptr.vmem [resolvable:$true] %s1102
          %1108 = dma.vmem_to_hbm [thread:$0]  %s1103, 256, %s1101, %s1089, 128, 128, 8
        $region68: #{tpu_custom_call.1} parent=47 // pred_fallthru
          _
      $region48: #{tpu_custom_call.1} parent=5 // pred_fallthru
        _
      %p1109 = scmp.le.s32.totalorder 2, %s21
      // Predicated region
      $region69: #{tpu_custom_call.1} parent=5 // pred_check
        %p1110 = pneg %p1109
      $region70: #{tpu_custom_call.1} parent=5 // pred_check_branch
        %1112 = sbr.rel (%p1110) target = $region72
      $region71: #{tpu_custom_call.1} parent=5 // pred_region
        %s1113 = ssub.s32 %s21, 2
        // Predicated region
        $region73: #{tpu_custom_call.1} parent=71 // pred_check
          %p1114 = pneg %p202
        $region74: #{tpu_custom_call.1} parent=71 // pred_check_branch
          %1116 = sbr.rel (%p1114) target = $region76
        $region75: #{tpu_custom_call.1} parent=71 // pred_region
          %s1117 = sand.u32 %s187, 1
          %s1118 = scalar_lea.sflag [#allocation6], %s1117
          %s1119 = sand.u32 %s187, 1
          %s1120 = smul.addr %s1119, 16
          %s1121 = scalar_lea.vmem [#allocation12], %s1120
          %1122 = dma.done %s1118, 256
        $region76: #{tpu_custom_call.1} parent=71 // pred_fallthru
          _
      $region72: #{tpu_custom_call.1} parent=5 // pred_fallthru
        _
    $region6: #{tpu_custom_call.1} parent=1 // loop_footer
      %s25 = sadd.s32 1, %s21
    $region7: #{tpu_custom_call.1} parent=1 // loop_footer_branch
      %20 = sbr.rel target = $region3
    $region8: #{tpu_custom_call.1} parent=1 // loop_exit
      _
    %1123 = vsyncpa [#allocation5], 1
    %s1124 = scalar_lea.sflag [#allocation5], 1
    %1125 = vsyncpa %s1124, 1
    %1126 = vsyncpa [#allocation8], 1
    %1127 = vsyncpa [#allocation11], 1
    %1128 = vsyncpa [#allocation6], 1
    %s1129 = scalar_lea.sflag [#allocation6], 1
    %1130 = vsyncpa %s1129, 1

</llo_original>
